<compile_context>
chip_gen: v6e
topology: v6e:2x2x1
jax: 0.10.0
libtpu: 0.0.40
codegen_flags: <defaults>
</compile_context>

<pallas_src>
import functools

import jax
import jax.numpy as jnp
from jax import lax
from jax.experimental import pallas as pl
from jax.experimental.pallas import tpu as pltpu


def _dgc_kernel(x_ref, w0_ref, b0_ref, w1_ref, b1_ref, out_ref, *, num_nodes):
    """One grid step processes Bb graph samples.

    x_ref  : (Bb*C, D)  node features (f32), Bb samples stacked along rows
    w0_ref : (D, Hp)    b0_ref : (1, Hp)   (Hp = hidden dim zero-padded to 128k)
    w1_ref : (Hp, Hp)   b1_ref : (1, Hp)
    out_ref: (Bb*C, Hp)
    """
    C = num_nodes
    x2 = x_ref[...].astype(jnp.float32)                     # (Bb*C, D)
    BC, D = x2.shape
    Bb = BC // C
    Hp = w0_ref.shape[1]

    # ---- compute_adjacency (kept in f32: the precision-sensitive stage) -------
    xb = x2.reshape(Bb, C, D)
    xc = xb - jnp.mean(xb, axis=-1, keepdims=True)           # centered features
    # cov[b] = xc[b] @ xc[b]^T : contract the feature axis directly (no transpose).
    cov = lax.dot_general(
        xc, xc, dimension_numbers=(((2,), (2,)), ((0,), (0,))),
        preferred_element_type=jnp.float32)                  # (Bb, C, C)

    inv_dm1 = jnp.float32(1.0 / (D - 1))
    # Row-oriented std straight from xc (independent of the cov matmul result).
    std_i = jnp.sqrt(jnp.sum(xc * xc, axis=-1, keepdims=True) * inv_dm1)   # (Bb, C, 1)
    # Column-oriented std from the cov diagonal (avoids a lane<->sublane relayout).
    row = lax.broadcasted_iota(jnp.int32, (C, C), 0)
    col = lax.broadcasted_iota(jnp.int32, (C, C), 1)
    eye = (row == col).astype(jnp.float32)                                  # (C, C)
    std_j = jnp.sqrt(jnp.sum(cov * eye, axis=-2, keepdims=True) * inv_dm1)  # (Bb, 1, C)

    denom = std_i * std_j + jnp.float32(1e-8)
    # Divide -> EUP reciprocal + VPU multiply (frees VALU issue slots).
    A = cov * pl.reciprocal(denom, approx=True)

    # ---- normalize_adjacency: L = D^-1/2 (A + I) D^-1/2 -----------------------
    A_hat = A + eye
    deg_i = jnp.sum(A, axis=-1, keepdims=True) + jnp.float32(1.0)   # rowsum(A_hat)
    deg_j = jnp.sum(A, axis=-2, keepdims=True) + jnp.float32(1.0)   # A is symmetric
    # Matches torch's D.pow(-0.5): non-positive degrees give NaN/Inf in both the
    # PyTorch module and here (inherent to the module's math, not a kernel bug).
    L = A_hat * lax.rsqrt(deg_i) * lax.rsqrt(deg_j)                 # (Bb, C, C) f32
    L16 = L.astype(jnp.bfloat16)

    # ---- GCN layers: relu(L @ (h @ W + b)) -------------------------------------
    # bf16 MXU operands, f32 accumulation; elementwise (bias, relu) stays f32.
    w0b = w0_ref[...].astype(jnp.bfloat16)
    w1b = w1_ref[...].astype(jnp.bfloat16)

    z = jnp.dot(x2.astype(jnp.bfloat16), w0b,
                preferred_element_type=jnp.float32) + b0_ref[...]   # (Bb*C, Hp)
    z = lax.dot_general(
        L16, z.reshape(Bb, C, Hp).astype(jnp.bfloat16),
        dimension_numbers=(((2,), (1,)), ((0,), (0,))),
        preferred_element_type=jnp.float32)                         # (Bb, C, Hp)
    z = jnp.maximum(z, 0.0).reshape(BC, Hp)

    z = jnp.dot(z.astype(jnp.bfloat16), w1b,
                preferred_element_type=jnp.float32) + b1_ref[...]   # (Bb*C, Hp)
    z = lax.dot_general(
        L16, z.reshape(Bb, C, Hp).astype(jnp.bfloat16),
        dimension_numbers=(((2,), (1,)), ((0,), (0,))),
        preferred_element_type=jnp.float32)
    z = jnp.maximum(z, 0.0)

    out_ref[...] = z.reshape(BC, Hp).astype(out_ref.dtype)


def _vmem_capacity_bytes():
    """Physical VMEM per TensorCore; conservative fallback if the query fails."""
    try:
        return int(pltpu.get_tpu_info().vmem_capacity_bytes)
    except Exception:
        return 64 << 20        # v7x per-core size; safe lower bound for v5e/v6e


def _est_vmem_bytes(block_b, C, D, Hp):
    """Rough per-grid-step VMEM footprint: double-buffered pipeline tiles plus
    in-kernel temporaries (xc, cov/A/A_hat/L, z buffers), all counted as f32."""
    bc = block_b * C
    tiles = 2 * (bc * D + bc * Hp + D * Hp + Hp * Hp + 2 * Hp) * 4
    temps = (bc * D + 4 * block_b * C * C + 3 * bc * Hp) * 4
    return tiles + temps


def _pick_block_b(B, C, D, Hp, *, target_rows=512, vmem_budget=None):
    """Largest legal divisor of B such that block_b*C <= target_rows, the estimated
    VMEM footprint fits the budget, and (when possible) the grid has >= 2 steps so
    both TensorCores of a dual-core chip (v7x) get work under 'parallel' semantics."""
    if vmem_budget is None:
        vmem_budget = _vmem_capacity_bytes() // 3   # headroom for buffering slack
    legal = [d for d in range(1, B + 1)
             if B % d == 0 and ((d * C) % 8 == 0 or d == B)]
    fits = [d for d in legal
            if d * C <= target_rows and _est_vmem_bytes(d, C, D, Hp) <= vmem_budget]
    if not fits:
        fits = [min(legal)]
    multi = [d for d in fits if B // d >= 2]
    pool = multi if multi else fits
    return max(pool)


def dynamic_graph_convolution(x, w0, b0, w1, b1, *, block_b=None,
                              out_dtype=jnp.float32):
    """Fused DynamicGraphConvolution forward.

    x : (B, C, D) node features.
    w0: (D, H), b0: (H,), w1: (H, H), b1: (H,)  -- weights stored (in_dim, out_dim),
    so the kernel computes x @ W + b (== torch Linear's x @ weight.T + bias).
    """
    B, C, D = x.shape
    H = w0.shape[1]

    # Lane-dense output: zero-pad the hidden dim to a multiple of 128 so the Linear N
    # dims and the output block's last dim are full-lane (no masked partial stores).
    # Padded columns stay exactly zero through both layers and are stripped below.
    Hp = -(-H // 128) * 128
    if Hp != H:
        w0 = jnp.pad(w0, ((0, 0), (0, Hp - H)))
        b0 = jnp.pad(b0, ((0, Hp - H),))
        w1 = jnp.pad(w1, ((0, Hp - H), (0, Hp - H)))
        b1 = jnp.pad(b1, ((0, Hp - H),))

    if block_b is None:
        block_b = _pick_block_b(B, C, D, Hp)
    assert B % block_b == 0
    grid = (B // block_b,)
    bc = block_b * C

    # Flatten batch*nodes into rows outside the kernel (free at the XLA level) so
    # every in-kernel reshape keeps the minor (lane) dim fixed (relayout-free).
    x2 = x.reshape(B * C, D).astype(jnp.float32)
    w0 = w0.astype(jnp.float32)
    w1 = w1.astype(jnp.float32)
    b0_2d = b0.reshape(1, Hp).astype(jnp.float32)
    b1_2d = b1.reshape(1, Hp).astype(jnp.float32)

    params = dict(dimension_semantics=("parallel",))
    est = _est_vmem_bytes(block_b, C, D, Hp)
    cap = _vmem_capacity_bytes()
    if est > (12 << 20):   # beyond the smallest default scoped-VMEM limit (v5e)
        params["vmem_limit_bytes"] = int(min(0.75 * cap, max(32 << 20, 2 * est)))

    out2 = pl.pallas_call(
        functools.partial(_dgc_kernel, num_nodes=C),
        out_shape=jax.ShapeDtypeStruct((B * C, Hp), out_dtype),
        grid=grid,
        in_specs=[
            pl.BlockSpec((bc, D), lambda b: (b, 0)),
            pl.BlockSpec((D, Hp), lambda b: (0, 0)),
            pl.BlockSpec((1, Hp), lambda b: (0, 0)),
            pl.BlockSpec((Hp, Hp), lambda b: (0, 0)),
            pl.BlockSpec((1, Hp), lambda b: (0, 0)),
        ],
        out_specs=pl.BlockSpec((bc, Hp), lambda b: (b, 0)),
        compiler_params=pltpu.CompilerParams(**params),
    )(x2, w0, b0_2d, w1, b1_2d)

    if Hp != H:
        out2 = out2[:, :H]
    return out2.reshape(B, C, H)


if __name__ == "__main__":
    # Small shapes consistent with the module's forward:
    # B=2 samples, C=8 graph nodes, input_dim=16, hidden_dim=32, num_layers=2.
    B, C, D, H = 2, 8, 16, 32

    key = jax.random.PRNGKey(0)
    kbase, knoise, k0, kb0, k1, kb1 = jax.random.split(key, 6)

    # Node features = shared per-sample signal + noise: keeps node-node correlations
    # positive so rowsum(A_hat) > 0 and D^-1/2 is well defined (the PyTorch module
    # itself produces NaN for strongly anti-correlated nodes).
    base = jax.random.normal(kbase, (B, 1, D), dtype=jnp.float32)
    noise = jax.random.normal(knoise, (B, C, D), dtype=jnp.float32)
    x = base + 0.5 * noise

    # Deterministic synthetic parameters, stored as (in_dim, out_dim).
    w0 = jax.random.normal(k0, (D, H), dtype=jnp.float32) * (1.0 / jnp.sqrt(D))
    b0 = jax.random.normal(kb0, (H,), dtype=jnp.float32) * 0.01
    w1 = jax.random.normal(k1, (H, H), dtype=jnp.float32) * (1.0 / jnp.sqrt(H))
    b1 = jax.random.normal(kb1, (H,), dtype=jnp.float32) * 0.01

    out = dynamic_graph_convolution(x, w0, b0, w1, b1)
    out = jax.block_until_ready(out)

    # Pure-JAX reference (same math as the PyTorch forward), full-f32 matmuls.
    def ref(x, w0, b0, w1, b1):
        hp = lax.Precision.HIGHEST
        mean = x.mean(axis=2, keepdims=True)
        xc = x - mean
        cov = jnp.einsum("bcd,bed->bce", xc, xc, precision=hp)
        std = jnp.sqrt((xc ** 2).sum(axis=2, keepdims=True) / (x.shape[2] - 1))
        denom = jnp.einsum("bci,bei->bce", std, std, precision=hp) + 1e-8
        A = cov / denom
        A_hat = A + jnp.eye(x.shape[1], dtype=x.dtype)[None]
        deg = A_hat.sum(axis=2)
        dis = deg ** -0.5
        L = A_hat * dis[:, :, None] * dis[:, None, :]
        h = jnp.einsum("bcd,dh->bch", x, w0, precision=hp) + b0
        h = jax.nn.relu(jnp.einsum("bce,beh->bch", L, h, precision=hp))
        h = jnp.einsum("bch,hk->bck", h, w1, precision=hp) + b1
        h = jax.nn.relu(jnp.einsum("bce,beh->bch", L, h, precision=hp))
        return h

    expected = ref(x, w0, b0, w1, b1)
    assert out.shape == (B, C, H)
    assert bool(jnp.all(jnp.isfinite(out)))
    err = float(jnp.max(jnp.abs(out - expected)))
    # bf16 MXU operands (f32 accumulate) + approx EUP reciprocal vs an f32-HIGHEST
    # reference: tolerance reflects the intentional mixed-precision matmuls.
    assert jnp.allclose(out, expected, atol=8e-2, rtol=5e-2), f"max abs err = {err}"
    print("KERNEL_OK")
</pallas_src>

<mosaic_0001>
module attributes {stable_mosaic.version = 11 : i64} {
  func.func @_dgc_kernel(%arg0: i32, %arg1: memref<8x16xf32, #tpu.memory_space<vmem>>, %arg2: memref<16x128xf32, #tpu.memory_space<vmem>>, %arg3: memref<1x128xf32, #tpu.memory_space<vmem>>, %arg4: memref<128x128xf32, #tpu.memory_space<vmem>>, %arg5: memref<1x128xf32, #tpu.memory_space<vmem>>, %arg6: memref<8x128xf32, #tpu.memory_space<vmem>>) attributes {dimension_semantics = [#tpu.dimension_semantics<parallel>], iteration_bounds = array<i64: 2>, scalar_prefetch = 0 : i64, scratch_operands = 0 : i64, tpu.core_type = #tpu.core_type<tc>, window_params = [{transform_indices = @transform_0, window_bounds = array<i64: 8, 16>}, {pipeline_mode = #tpu.pipeline_mode<synchronous>, transform_indices = @transform_1, window_bounds = array<i64: 16, 128>}, {pipeline_mode = #tpu.pipeline_mode<synchronous>, transform_indices = @transform_2, window_bounds = array<i64: 1, 128>}, {pipeline_mode = #tpu.pipeline_mode<synchronous>, transform_indices = @transform_3, window_bounds = array<i64: 128, 128>}, {pipeline_mode = #tpu.pipeline_mode<synchronous>, transform_indices = @transform_4, window_bounds = array<i64: 1, 128>}, {transform_indices = @transform_5, window_bounds = array<i64: 8, 128>}]} {
    %c0 = arith.constant 0 : index
    %c0_0 = arith.constant 0 : index
    %0 = vector.load %arg1[%c0, %c0_0] : memref<8x16xf32, #tpu.memory_space<vmem>>, vector<8x16xf32>
    %1 = vector.shape_cast %0 : vector<8x16xf32> to vector<1x8x16xf32>
    %cst = arith.constant dense<0.000000e+00> : vector<1x8xf32>
    %2 = vector.multi_reduction <add>, %1, %cst [2] : vector<1x8x16xf32> to vector<1x8xf32>
    %3 = vector.shape_cast %2 : vector<1x8xf32> to vector<1x8x1xf32>
    %cst_1 = arith.constant 1.600000e+01 : f32
    %4 = vector.broadcast %cst_1 : f32 to vector<1x8x1xf32>
    %5 = arith.divf %3, %4 : vector<1x8x1xf32>
    %6 = vector.broadcast %5 : vector<1x8x1xf32> to vector<1x8x16xf32>
    %7 = arith.subf %1, %6 : vector<1x8x16xf32>
    %cst_2 = arith.constant dense<0.000000e+00> : vector<1x8x8xf32>
    %8 = tpu.matmul %7, %7, %cst_2 {dimension_numbers = #tpu.dot_dimension_numbers<[2], [2], [1], [1], [0, 0, 0, 1, 1, 1], [0], [0]>} : vector<1x8x16xf32>, vector<1x8x16xf32>, vector<1x8x8xf32> -> vector<1x8x8xf32>
    %9 = arith.mulf %7, %7 : vector<1x8x16xf32>
    %cst_3 = arith.constant dense<0.000000e+00> : vector<1x8xf32>
    %10 = vector.multi_reduction <add>, %9, %cst_3 [2] : vector<1x8x16xf32> to vector<1x8xf32>
    %11 = vector.shape_cast %10 : vector<1x8xf32> to vector<1x8x1xf32>
    %cst_4 = arith.constant 0.0666666701 : f32
    %12 = vector.broadcast %cst_4 : f32 to vector<1x8x1xf32>
    %13 = arith.mulf %11, %12 : vector<1x8x1xf32>
    %14 = math.sqrt %13 : vector<1x8x1xf32>
    %15 = tpu.iota {dimensions = array<i32: 0>} : vector<8x8xi32>
    %16 = tpu.iota {dimensions = array<i32: 1>} : vector<8x8xi32>
    %17 = arith.cmpi eq, %15, %16 : vector<8x8xi32>
    %18 = arith.extui %17 : vector<8x8xi1> to vector<8x8xi32>
    %19 = arith.sitofp %18 : vector<8x8xi32> to vector<8x8xf32>
    %20 = vector.shape_cast %19 : vector<8x8xf32> to vector<1x8x8xf32>
    %21 = arith.mulf %8, %20 : vector<1x8x8xf32>
    %cst_5 = arith.constant dense<0.000000e+00> : vector<1x8xf32>
    %22 = vector.multi_reduction <add>, %21, %cst_5 [1] : vector<1x8x8xf32> to vector<1x8xf32>
    %23 = vector.shape_cast %22 : vector<1x8xf32> to vector<1x1x8xf32>
    %cst_6 = arith.constant 0.0666666701 : f32
    %24 = vector.broadcast %cst_6 : f32 to vector<1x1x8xf32>
    %25 = arith.mulf %23, %24 : vector<1x1x8xf32>
    %26 = math.sqrt %25 : vector<1x1x8xf32>
    %27 = vector.broadcast %14 : vector<1x8x1xf32> to vector<1x8x8xf32>
    %28 = vector.broadcast %26 : vector<1x1x8xf32> to vector<1x8x8xf32>
    %29 = arith.mulf %27, %28 : vector<1x8x8xf32>
    %cst_7 = arith.constant 9.99999993E-9 : f32
    %30 = vector.broadcast %cst_7 : f32 to vector<1x8x8xf32>
    %31 = arith.addf %29, %30 : vector<1x8x8xf32>
    %32 = tpu.reciprocal %31 {approx = true} : vector<1x8x8xf32> -> vector<1x8x8xf32>
    %33 = arith.mulf %8, %32 : vector<1x8x8xf32>
    %34 = vector.shape_cast %19 : vector<8x8xf32> to vector<1x8x8xf32>
    %35 = arith.addf %33, %34 : vector<1x8x8xf32>
    %cst_8 = arith.constant dense<0.000000e+00> : vector<1x8xf32>
    %36 = vector.multi_reduction <add>, %33, %cst_8 [2] : vector<1x8x8xf32> to vector<1x8xf32>
    %37 = vector.shape_cast %36 : vector<1x8xf32> to vector<1x8x1xf32>
    %cst_9 = arith.constant 1.000000e+00 : f32
    %38 = vector.broadcast %cst_9 : f32 to vector<1x8x1xf32>
    %39 = arith.addf %37, %38 : vector<1x8x1xf32>
    %cst_10 = arith.constant dense<0.000000e+00> : vector<1x8xf32>
    %40 = vector.multi_reduction <add>, %33, %cst_10 [1] : vector<1x8x8xf32> to vector<1x8xf32>
    %41 = vector.shape_cast %40 : vector<1x8xf32> to vector<1x1x8xf32>
    %cst_11 = arith.constant 1.000000e+00 : f32
    %42 = vector.broadcast %cst_11 : f32 to vector<1x1x8xf32>
    %43 = arith.addf %41, %42 : vector<1x1x8xf32>
    %44 = math.rsqrt %39 : vector<1x8x1xf32>
    %45 = vector.broadcast %44 : vector<1x8x1xf32> to vector<1x8x8xf32>
    %46 = arith.mulf %35, %45 : vector<1x8x8xf32>
    %47 = math.rsqrt %43 : vector<1x1x8xf32>
    %48 = vector.broadcast %47 : vector<1x1x8xf32> to vector<1x8x8xf32>
    %49 = arith.mulf %46, %48 : vector<1x8x8xf32>
    %50 = arith.truncf %49 : vector<1x8x8xf32> to vector<1x8x8xbf16>
    %c0_12 = arith.constant 0 : index
    %c0_13 = arith.constant 0 : index
    %51 = vector.load %arg2[%c0_12, %c0_13] : memref<16x128xf32, #tpu.memory_space<vmem>>, vector<16x128xf32>
    %52 = arith.truncf %51 : vector<16x128xf32> to vector<16x128xbf16>
    %c0_14 = arith.constant 0 : index
    %c0_15 = arith.constant 0 : index
    %53 = vector.load %arg4[%c0_14, %c0_15] : memref<128x128xf32, #tpu.memory_space<vmem>>, vector<128x128xf32>
    %54 = arith.truncf %53 : vector<128x128xf32> to vector<128x128xbf16>
    %55 = arith.truncf %0 : vector<8x16xf32> to vector<8x16xbf16>
    %cst_16 = arith.constant dense<0.000000e+00> : vector<8x128xf32>
    %56 = tpu.matmul %55, %52, %cst_16 {dimension_numbers = #tpu.dot_dimension_numbers<[1], [0], [0], [1], [0, 0, 1, 1], [], []>} : vector<8x16xbf16>, vector<16x128xbf16>, vector<8x128xf32> -> vector<8x128xf32>
    %c0_17 = arith.constant 0 : index
    %c0_18 = arith.constant 0 : index
    %57 = vector.load %arg3[%c0_17, %c0_18] : memref<1x128xf32, #tpu.memory_space<vmem>>, vector<1x128xf32>
    %58 = vector.broadcast %57 : vector<1x128xf32> to vector<8x128xf32>
    %59 = arith.addf %56, %58 : vector<8x128xf32>
    %60 = vector.shape_cast %59 : vector<8x128xf32> to vector<1x8x128xf32>
    %61 = arith.truncf %60 : vector<1x8x128xf32> to vector<1x8x128xbf16>
    %cst_19 = arith.constant dense<0.000000e+00> : vector<1x8x128xf32>
    %62 = tpu.matmul %50, %61, %cst_19 {dimension_numbers = #tpu.dot_dimension_numbers<[2], [1], [1], [2], [0, 0, 0, 1, 1, 2], [0], [0]>} : vector<1x8x8xbf16>, vector<1x8x128xbf16>, vector<1x8x128xf32> -> vector<1x8x128xf32>
    %cst_20 = arith.constant 0.000000e+00 : f32
    %63 = vector.broadcast %cst_20 : f32 to vector<1x8x128xf32>
    %64 = arith.maximumf %62, %63 : vector<1x8x128xf32>
    %65 = vector.shape_cast %64 : vector<1x8x128xf32> to vector<8x128xf32>
    %66 = arith.truncf %65 : vector<8x128xf32> to vector<8x128xbf16>
    %cst_21 = arith.constant dense<0.000000e+00> : vector<8x128xf32>
    %67 = tpu.matmul %66, %54, %cst_21 {dimension_numbers = #tpu.dot_dimension_numbers<[1], [0], [0], [1], [0, 0, 1, 1], [], []>} : vector<8x128xbf16>, vector<128x128xbf16>, vector<8x128xf32> -> vector<8x128xf32>
    %c0_22 = arith.constant 0 : index
    %c0_23 = arith.constant 0 : index
    %68 = vector.load %arg5[%c0_22, %c0_23] : memref<1x128xf32, #tpu.memory_space<vmem>>, vector<1x128xf32>
    %69 = vector.broadcast %68 : vector<1x128xf32> to vector<8x128xf32>
    %70 = arith.addf %67, %69 : vector<8x128xf32>
    %71 = vector.shape_cast %70 : vector<8x128xf32> to vector<1x8x128xf32>
    %72 = arith.truncf %71 : vector<1x8x128xf32> to vector<1x8x128xbf16>
    %cst_24 = arith.constant dense<0.000000e+00> : vector<1x8x128xf32>
    %73 = tpu.matmul %50, %72, %cst_24 {dimension_numbers = #tpu.dot_dimension_numbers<[2], [1], [1], [2], [0, 0, 0, 1, 1, 2], [0], [0]>} : vector<1x8x8xbf16>, vector<1x8x128xbf16>, vector<1x8x128xf32> -> vector<1x8x128xf32>
    %cst_25 = arith.constant 0.000000e+00 : f32
    %74 = vector.broadcast %cst_25 : f32 to vector<1x8x128xf32>
    %75 = arith.maximumf %73, %74 : vector<1x8x128xf32>
    %76 = vector.shape_cast %75 : vector<1x8x128xf32> to vector<8x128xf32>
    %c0_26 = arith.constant 0 : index
    %c0_27 = arith.constant 0 : index
    %77 = vector.load %arg6[%c0_26, %c0_27] : memref<8x128xf32, #tpu.memory_space<vmem>>, vector<8x128xf32>
    tpu.vector_store %arg6[%c0_26, %c0_27], %76 {strides = array<i32>} : memref<8x128xf32, #tpu.memory_space<vmem>>, vector<8x128xf32>,
    return
  }
  func.func @transform_0(%arg0: i32) -> (i32, i32) {
    %c0_i32 = arith.constant 0 : i32
    %c0_i32_0 = arith.constant 0 : i32
    return %arg0, %c0_i32 : i32, i32
  }
  func.func @transform_1(%arg0: i32) -> (i32, i32) {
    %c0_i32 = arith.constant 0 : i32
    %c0_i32_0 = arith.constant 0 : i32
    %c0_i32_1 = arith.constant 0 : i32
    return %c0_i32, %c0_i32_0 : i32, i32
  }
  func.func @transform_2(%arg0: i32) -> (i32, i32) {
    %c0_i32 = arith.constant 0 : i32
    %c0_i32_0 = arith.constant 0 : i32
    %c0_i32_1 = arith.constant 0 : i32
    return %c0_i32, %c0_i32_0 : i32, i32
  }
  func.func @transform_3(%arg0: i32) -> (i32, i32) {
    %c0_i32 = arith.constant 0 : i32
    %c0_i32_0 = arith.constant 0 : i32
    %c0_i32_1 = arith.constant 0 : i32
    return %c0_i32, %c0_i32_0 : i32, i32
  }
  func.func @transform_4(%arg0: i32) -> (i32, i32) {
    %c0_i32 = arith.constant 0 : i32
    %c0_i32_0 = arith.constant 0 : i32
    %c0_i32_1 = arith.constant 0 : i32
    return %c0_i32, %c0_i32_0 : i32, i32
  }
  func.func @transform_5(%arg0: i32) -> (i32, i32) {
    %c0_i32 = arith.constant 0 : i32
    %c0_i32_0 = arith.constant 0 : i32
    return %arg0, %c0_i32 : i32, i32
  }
}

</mosaic_0001>

<llo_original>
// kernel: tpu_custom_call.1
$region0: #{tpu_custom_call.1}
  #allocation0 [shape = 'u32[]', space=smem, size = 0x4, offset = 0x4, fixed_abs, tag = 'smem constant byte address 0x4 - core index']
  #allocation1 [shape = 'u32[144,128]{1,0:T(1,128)}', space=vmem, size = 0x12000, scoped, tag = 'internal scratch']
  %s0 = inlined_call_operand.hbm [shape: f32[16,16], index: 0, kind: input, shape index: {}]
  %s1 = inlined_call_operand.hbm [shape: f32[16,128], index: 1, kind: input, shape index: {}]
  %s2 = inlined_call_operand.vmem [shape: f32[1,128], index: 2, kind: input, shape index: {}]
  %s3 = inlined_call_operand.hbm [shape: f32[128,128], index: 3, kind: input, shape index: {}]
  %s4 = inlined_call_operand.vmem [shape: f32[1,128], index: 4, kind: input, shape index: {}]
  %s5 = inlined_call_operand.hbm [shape: f32[16,128], index: 5, kind: output, shape index: {}]
  %s6 = sld [smem:[#allocation0]]
  $region65: #{tpu_custom_call.1} parent=0
    _
  %s8 = ssub.s32 1, %s6
  %s9 = scalar_select 0, %s8, %s6
  $region1: #{tpu_custom_call.1} parent=0
    #allocation2 [shape = 'u8[8192]{0}', space=vmem, size = 0x2000, scoped, tag = 'input window, operand 0']
    #allocation3 [shape = 's32[2]{0}', space=sflag, size = 0x8, scoped, tag = 'scoped memory for tpu_custom_call.1']
    #allocation4 [shape = 's32[2]{0}', space=sflag, size = 0x8, scoped, tag = 'scoped memory for tpu_custom_call.1']
    #allocation5 [shape = 'u8[8192]{0}', space=vmem, size = 0x2000, scoped, tag = 'input window, operand 1, single buffered']
    #allocation6 [shape = 's32[1]{0}', space=sflag, size = 0x4, scoped, tag = 'scoped memory for tpu_custom_call.1']
    #allocation7 [shape = 'u8[65536]{0}', space=vmem, size = 0x10000, scoped, tag = 'input window, operand 3, single buffered']
    #allocation8 [shape = 'u8[8192]{0}', space=vmem, size = 0x2000, scoped, tag = 'output window, operand 0']
    %10 = vsyncpa [#allocation3], 0
    %s11 = scalar_lea.sflag [#allocation3], 1
    %12 = vsyncpa %s11, 0
    %13 = vsyncpa [#allocation6], 0
    %14 = vsyncpa [#allocation4], 0
    %s15 = scalar_lea.sflag [#allocation4], 1
    %16 = vsyncpa %s15, 0
    loop: start=0, step=1, limit=4
    $region2: #{tpu_custom_call.1} parent=1 // loop_pre_header
      _
    $region3: #{tpu_custom_call.1} parent=1 // loop_header
      %s18 = sphi 0, %s22
      %p19 = scmp.ge.s32.totalorder %s18, 4
      %s28 = sphi 0, %s30
      %s31 = sphi 0, %s28
      %s32 = sphi 0, %s31
      %s48 = sphi 0, %s32
      %s52 = sphi 0, %s52
      %s54 = sphi 0, %s52
      %s55 = sphi 0, %s54
      %s69 = sphi 0, %s55
      %s73 = sphi 0, %s73
      %s75 = sphi 0, %s73
      %s76 = sphi 0, %s75
      %s90 = sphi 0, %s76
      %s94 = sphi 0, %s94
      %s96 = sphi 0, %s94
      %s97 = sphi 0, %s96
      %s111 = sphi 0, %s97
      %s115 = sphi 0, %s115
      %s117 = sphi 0, %s115
      %s118 = sphi 0, %s117
      %s132 = sphi 0, %s118
      %s138 = sphi 0, %s140
      %s141 = sphi 0, %s138
      %s142 = sphi 0, %s141
      %s158 = sphi 0, %s142
    $region4: #{tpu_custom_call.1} parent=1 // loop_header_branch
      %21 = sbr.rel (%p19) target = $region8
    $region5: #{tpu_custom_call.1} parent=1 // loop_body
      %s23 = ssub.s32 %s18, 1
      %s24 = ssub.s32 %s18, 2
      %s25 = sadd.s32 %s18, 1
      %s26 = ssub.s32 %s18, %s25
      %p27 = scmp.eq.s32.totalorder %s26, 0
      %s29 = sadd.s32 %s28, 1
      %s30 = scalar_select %p27, %s28, %s29
      %p33 = pneg %p27
      %p34 = scmp.eq.s32.totalorder %s18, 1
      %p35 = por %p33, %p34
      %p36 = scmp.ne.s32.totalorder %s28, %s31
      %p37 = scmp.eq.s32.totalorder %s18, 0
      %p38 = por %p36, %p37
      %p39 = scmp.ne.s32.totalorder %s28, %s31
      %p40 = scmp.eq.s32.totalorder %s23, 1
      %p41 = por %p39, %p40
      %p42 = scmp.ne.s32.totalorder %s31, %s32
      %p43 = scmp.eq.s32.totalorder %s23, 0
      %p44 = por %p42, %p43
      %p45 = scmp.ne.s32.totalorder %s31, %s32
      %p46 = scmp.eq.s32.totalorder %s24, 1
      %p47 = por %p45, %p46
      %p49 = scmp.ne.s32.totalorder %s32, %s48
      %p50 = scmp.eq.s32.totalorder %s24, 0
      %p51 = por %p49, %p50
      %s53 = sadd.s32 %s52, 1
      %p56 = scmp.eq.s32.totalorder %s18, 1
      %p57 = scmp.ne.s32.totalorder %s52, %s54
      %p58 = scmp.eq.s32.totalorder %s18, 0
      %p59 = por %p57, %p58
      %p60 = scmp.ne.s32.totalorder %s52, %s54
      %p61 = scmp.eq.s32.totalorder %s23, 1
      %p62 = por %p60, %p61
      %p63 = scmp.ne.s32.totalorder %s54, %s55
      %p64 = scmp.eq.s32.totalorder %s23, 0
      %p65 = por %p63, %p64
      %p66 = scmp.ne.s32.totalorder %s54, %s55
      %p67 = scmp.eq.s32.totalorder %s24, 1
      %p68 = por %p66, %p67
      %p70 = scmp.ne.s32.totalorder %s55, %s69
      %p71 = scmp.eq.s32.totalorder %s24, 0
      %p72 = por %p70, %p71
      %s74 = sadd.s32 %s73, 1
      %p77 = scmp.eq.s32.totalorder %s18, 1
      %p78 = scmp.ne.s32.totalorder %s73, %s75
      %p79 = scmp.eq.s32.totalorder %s18, 0
      %p80 = por %p78, %p79
      %p81 = scmp.ne.s32.totalorder %s73, %s75
      %p82 = scmp.eq.s32.totalorder %s23, 1
      %p83 = por %p81, %p82
      %p84 = scmp.ne.s32.totalorder %s75, %s76
      %p85 = scmp.eq.s32.totalorder %s23, 0
      %p86 = por %p84, %p85
      %p87 = scmp.ne.s32.totalorder %s75, %s76
      %p88 = scmp.eq.s32.totalorder %s24, 1
      %p89 = por %p87, %p88
      %p91 = scmp.ne.s32.totalorder %s76, %s90
      %p92 = scmp.eq.s32.totalorder %s24, 0
      %p93 = por %p91, %p92
      %s95 = sadd.s32 %s94, 1
      %p98 = scmp.eq.s32.totalorder %s18, 1
      %p99 = scmp.ne.s32.totalorder %s94, %s96
      %p100 = scmp.eq.s32.totalorder %s18, 0
      %p101 = por %p99, %p100
      %p102 = scmp.ne.s32.totalorder %s94, %s96
      %p103 = scmp.eq.s32.totalorder %s23, 1
      %p104 = por %p102, %p103
      %p105 = scmp.ne.s32.totalorder %s96, %s97
      %p106 = scmp.eq.s32.totalorder %s23, 0
      %p107 = por %p105, %p106
      %p108 = scmp.ne.s32.totalorder %s96, %s97
      %p109 = scmp.eq.s32.totalorder %s24, 1
      %p110 = por %p108, %p109
      %p112 = scmp.ne.s32.totalorder %s97, %s111
      %p113 = scmp.eq.s32.totalorder %s24, 0
      %p114 = por %p112, %p113
      %s116 = sadd.s32 %s115, 1
      %p119 = scmp.eq.s32.totalorder %s18, 1
      %p120 = scmp.ne.s32.totalorder %s115, %s117
      %p121 = scmp.eq.s32.totalorder %s18, 0
      %p122 = por %p120, %p121
      %p123 = scmp.ne.s32.totalorder %s115, %s117
      %p124 = scmp.eq.s32.totalorder %s23, 1
      %p125 = por %p123, %p124
      %p126 = scmp.ne.s32.totalorder %s117, %s118
      %p127 = scmp.eq.s32.totalorder %s23, 0
      %p128 = por %p126, %p127
      %p129 = scmp.ne.s32.totalorder %s117, %s118
      %p130 = scmp.eq.s32.totalorder %s24, 1
      %p131 = por %p129, %p130
      %p133 = scmp.ne.s32.totalorder %s118, %s132
      %p134 = scmp.eq.s32.totalorder %s24, 0
      %p135 = por %p133, %p134
      %s136 = ssub.s32 %s18, %s25
      %p137 = scmp.eq.s32.totalorder %s136, 0
      %s139 = sadd.s32 %s138, 1
      %s140 = scalar_select %p137, %s138, %s139
      %p143 = pneg %p137
      %p144 = scmp.eq.s32.totalorder %s18, 1
      %p145 = por %p143, %p144
      %p146 = scmp.ne.s32.totalorder %s138, %s141
      %p147 = scmp.eq.s32.totalorder %s18, 0
      %p148 = por %p146, %p147
      %p149 = scmp.ne.s32.totalorder %s138, %s141
      %p150 = scmp.eq.s32.totalorder %s23, 1
      %p151 = por %p149, %p150
      %p152 = scmp.ne.s32.totalorder %s141, %s142
      %p153 = scmp.eq.s32.totalorder %s23, 0
      %p154 = por %p152, %p153
      %p155 = scmp.ne.s32.totalorder %s141, %s142
      %p156 = scmp.eq.s32.totalorder %s24, 1
      %p157 = por %p155, %p156
      %p159 = scmp.ne.s32.totalorder %s142, %s158
      %p160 = scmp.eq.s32.totalorder %s24, 0
      %p161 = por %p159, %p160
      %p162 = scmp.le.s32.totalorder 1, %s18
      %p163 = scmp.lt.s32.totalorder %s18, 3
      %p164 = pnand %p162, %p163
      %p165 = pneg %p164
      // Predicated region
      $region9: #{tpu_custom_call.1} parent=5 // pred_check
        _
      $region10: #{tpu_custom_call.1} parent=5 // pred_check_branch
        %167 = sbr.rel (%p164) target = $region12
      $region11: #{tpu_custom_call.1} parent=5 // pred_region
        %s168 = ssub.s32 %s18, 1
        // Predicated region
        $region13: #{tpu_custom_call.1} parent=11 // pred_check
          %p169 = pneg %p65
        $region14: #{tpu_custom_call.1} parent=11 // pred_check_branch
          %171 = sbr.rel (%p169) target = $region16
        $region15: #{tpu_custom_call.1} parent=11 // pred_region
          %s173 = ssub.s32 256, 256
          %174 = vsyncadd [#allocation6], %s173
          %s175 = sshll.u32 [#allocation5], 4
          %s176 = int_to_ptr.vmem [resolvable:$true] %s175
          %181 = dma.hbm_to_vmem [thread:$0]  %s1, 256, %s176, [#allocation6], 128, 128, 8
        $region16: #{tpu_custom_call.1} parent=11 // pred_fallthru
          _
        // Predicated region
        $region17: #{tpu_custom_call.1} parent=11 // pred_check
          %p182 = pneg %p86
        $region18: #{tpu_custom_call.1} parent=11 // pred_check_branch
          %184 = sbr.rel (%p182) target = $region20
        $region19: #{tpu_custom_call.1} parent=11 // pred_region
          _
        $region20: #{tpu_custom_call.1} parent=11 // pred_fallthru
          _
        // Predicated region
        $region21: #{tpu_custom_call.1} parent=11 // pred_check
          %p185 = pneg %p107
        $region22: #{tpu_custom_call.1} parent=11 // pred_check_branch
          %187 = sbr.rel (%p185) target = $region24
        $region23: #{tpu_custom_call.1} parent=11 // pred_region
          %s189 = ssub.s32 2048, 2048
          %190 = vsyncadd [#allocation6], %s189
          %s191 = sshll.u32 [#allocation7], 4
          %s192 = int_to_ptr.vmem [resolvable:$true] %s191
          %197 = dma.hbm_to_vmem [thread:$0]  %s3, 2048, %s192, [#allocation6], 128, 128, 8
        $region24: #{tpu_custom_call.1} parent=11 // pred_fallthru
          _
        // Predicated region
        $region25: #{tpu_custom_call.1} parent=11 // pred_check
          %p198 = pneg %p128
        $region26: #{tpu_custom_call.1} parent=11 // pred_check_branch
          %200 = sbr.rel (%p198) target = $region28
        $region27: #{tpu_custom_call.1} parent=11 // pred_region
          _
        $region28: #{tpu_custom_call.1} parent=11 // pred_fallthru
          _
      $region12: #{tpu_custom_call.1} parent=5 // pred_fallthru
        _
      %p201 = scmp.lt.s32.totalorder %s18, 2
      // Predicated region
      $region29: #{tpu_custom_call.1} parent=5 // pred_check
        %p202 = pneg %p201
      $region30: #{tpu_custom_call.1} parent=5 // pred_check_branch
        %204 = sbr.rel (%p202) target = $region32
      $region31: #{tpu_custom_call.1} parent=5 // pred_region
        // Predicated region
        $region33: #{tpu_custom_call.1} parent=31 // pred_check
          %p205 = pneg %p38
        $region34: #{tpu_custom_call.1} parent=31 // pred_check_branch
          %207 = sbr.rel (%p205) target = $region36
        $region35: #{tpu_custom_call.1} parent=31 // pred_region
          %s208 = sand.u32 %s28, 1
          %s209 = scalar_lea.sflag [#allocation3], %s208
          %s210 = sand.u32 %s28, 1
          %s211 = smul.addr %s210, 8
          %s212 = scalar_lea.vmem [#allocation2], %s211
          %s214 = ssub.s32 128, 128
          %215 = vsyncadd %s209, %s214
          %s216 = smul.addr %s18, 128
          %s217 = scalar_lea.hbm %s0, %s216
          %s219 = sshll.u32 %s212, 4
          %s220 = int_to_ptr.vmem [resolvable:$true] %s219
          %222 = dma.hbm_to_vmem [thread:$0]  %s217, 128, %s220, %s209
        $region36: #{tpu_custom_call.1} parent=31 // pred_fallthru
          _
      $region32: #{tpu_custom_call.1} parent=5 // pred_fallthru
        _
      %p223 = scmp.le.s32.totalorder 1, %s18
      %p224 = scmp.lt.s32.totalorder %s18, 3
      %p225 = pnand %p223, %p224
      %p226 = pneg %p225
      // Predicated region
      $region37: #{tpu_custom_call.1} parent=5 // pred_check
        _
      $region38: #{tpu_custom_call.1} parent=5 // pred_check_branch
        %228 = sbr.rel (%p225) target = $region40
      $region39: #{tpu_custom_call.1} parent=5 // pred_region
        %s229 = ssub.s32 %s18, 1
        %s230 = sand.u32 %s31, 1
        %s231 = scalar_lea.sflag [#allocation3], %s230
        %s232 = sand.u32 %s31, 1
        %s233 = smul.addr %s232, 8
        %s234 = scalar_lea.vmem [#allocation2], %s233
        // Predicated region
        $region41: #{tpu_custom_call.1} parent=39 // pred_check
          %p235 = pneg %p44
        $region42: #{tpu_custom_call.1} parent=39 // pred_check_branch
          %237 = sbr.rel (%p235) target = $region44
        $region43: #{tpu_custom_call.1} parent=39 // pred_region
          %238 = dma.done %s231, 128
        $region44: #{tpu_custom_call.1} parent=39 // pred_fallthru
          _
        // Predicated region
        $region45: #{tpu_custom_call.1} parent=39 // pred_check
          %p239 = pneg %p65
        $region46: #{tpu_custom_call.1} parent=39 // pred_check_branch
          %241 = sbr.rel (%p239) target = $region48
        $region47: #{tpu_custom_call.1} parent=39 // pred_region
          %242 = dma.done [#allocation6], 256
        $region48: #{tpu_custom_call.1} parent=39 // pred_fallthru
          _
        // Predicated region
        $region49: #{tpu_custom_call.1} parent=39 // pred_check
          %p243 = pneg %p107
        $region50: #{tpu_custom_call.1} parent=39 // pred_check_branch
          %245 = sbr.rel (%p243) target = $region52
        $region51: #{tpu_custom_call.1} parent=39 // pred_region
          %246 = dma.done [#allocation6], 2048
        $region52: #{tpu_custom_call.1} parent=39 // pred_fallthru
          _
        %s247 = sand.u32 %s31, 1
        %s248 = scalar_lea.sflag [#allocation3], %s247
        %s249 = sand.u32 %s31, 1
        %s250 = smul.addr %s249, 8
        %s251 = scalar_lea.vmem [#allocation2], %s250
        %p252 = pneg %p44
        %p253 = pneg %p41
        %p254 = pneg %p65
        %p255 = pneg %p62
        %p256 = pneg %p86
        %p257 = pneg %p83
        %p258 = pneg %p107
        %p259 = pneg %p104
        %p260 = pneg %p128
        %p261 = pneg %p125
        %p262 = pneg %p154
        %p263 = pneg %p151
        %s264 = sand.u32 %s141, 1
        %s265 = scalar_lea.sflag [#allocation4], %s264
        %s266 = sand.u32 %s141, 1
        %s267 = smul.addr %s266, 8
        %s268 = scalar_lea.vmem [#allocation8], %s267
        %v270 = vld [vmem:[%s234] sm:$0xff]
        %vm271 = vcmask 130048
        %v272 = vsel %vm271, %v270, 0.0
        %273 = vadd.xlane.f32.xlu0 %v272
        %v274 = vpop.xlane.xlu0 %273
        %v275 = vrcp.pop 16.0
        %v276 = vmul.f32 %v274, %v275
        %v277 = vsub.f32 %v270, %v276
        %v279 = vsel %vm271, %v277, 0
        %281 = vmatprep.subr.mxu0 0.0
        %282 = vmatpush1.xpose.msra.mxu0 0.0
        %283 = vmatprep.subr.mxu0 0.0
        %284 = vmatpush1.xpose.msra.mxu0 0.0
        %285 = vmatprep.subr.mxu0 0.0
        %286 = vmatpush1.xpose.msra.mxu0 0.0
        %287 = vmatprep.subr.mxu0 0.0
        %288 = vmatpush1.xpose.msra.mxu0 0.0
        %289 = vmatprep.subr.mxu0 0.0
        %290 = vmatpush1.xpose.msra.mxu0 0.0
        %291 = vmatprep.subr.mxu0 0.0
        %292 = vmatpush1.xpose.msra.mxu0 0.0
        %293 = vmatprep.subr.mxu0 0.0
        %294 = vmatpush1.xpose.msra.mxu0 0.0
        %295 = vmatprep.subr.mxu0 0.0
        %296 = vmatpush1.xpose.msra.mxu0 0.0
        %297 = vmatprep.subr.mxu0 0.0
        %298 = vmatpush1.xpose.msra.mxu0 0.0
        %299 = vmatprep.subr.mxu0 0.0
        %300 = vmatpush1.xpose.msra.mxu0 0.0
        %301 = vmatprep.subr.mxu0 0.0
        %302 = vmatpush1.xpose.msra.mxu0 0.0
        %303 = vmatprep.subr.mxu0 0.0
        %304 = vmatpush1.xpose.msra.mxu0 0.0
        %305 = vmatprep.subr.mxu0 0.0
        %306 = vmatpush1.xpose.msra.mxu0 0.0
        %307 = vmatprep.subr.mxu0 0.0
        %308 = vmatpush1.xpose.msra.mxu0 0.0
        %309 = vmatprep.subr.mxu0 0.0
        %310 = vmatpush1.xpose.msra.mxu0 0.0
        %311 = vmatprep.subr.mxu0 0.0
        %312 = vmatpush1.xpose.msra.mxu0 %v279
        %313 = vmatprep.subr.mxu0 0.0
        %314 = vmatpush2.xpose.msra.mxu0 0.0
        %315 = vmatprep.subr.mxu0 0.0
        %316 = vmatpush2.xpose.msra.mxu0 0.0
        %317 = vmatprep.subr.mxu0 0.0
        %318 = vmatpush2.xpose.msra.mxu0 0.0
        %319 = vmatprep.subr.mxu0 0.0
        %320 = vmatpush2.xpose.msra.mxu0 0.0
        %321 = vmatprep.subr.mxu0 0.0
        %322 = vmatpush2.xpose.msra.mxu0 0.0
        %323 = vmatprep.subr.mxu0 0.0
        %324 = vmatpush2.xpose.msra.mxu0 0.0
        %325 = vmatprep.subr.mxu0 0.0
        %326 = vmatpush2.xpose.msra.mxu0 0.0
        %327 = vmatprep.subr.mxu0 0.0
        %328 = vmatpush2.xpose.msra.mxu0 0.0
        %329 = vmatprep.subr.mxu0 0.0
        %330 = vmatpush2.xpose.msra.mxu0 0.0
        %331 = vmatprep.subr.mxu0 0.0
        %332 = vmatpush2.xpose.msra.mxu0 0.0
        %333 = vmatprep.subr.mxu0 0.0
        %334 = vmatpush2.xpose.msra.mxu0 0.0
        %335 = vmatprep.subr.mxu0 0.0
        %336 = vmatpush2.xpose.msra.mxu0 0.0
        %337 = vmatprep.subr.mxu0 0.0
        %338 = vmatpush2.xpose.msra.mxu0 0.0
        %339 = vmatprep.subr.mxu0 0.0
        %340 = vmatpush2.xpose.msra.mxu0 0.0
        %341 = vmatprep.subr.mxu0 0.0
        %342 = vmatpush2.xpose.msra.mxu0 0.0
        %343 = vmatprep.subr.mxu0 0.0
        %344 = vmatpush2.xpose.msra.mxu0 0.0
        %345 = vmatprep.mubr.f32.mxu0 0.0
        %346 = vmatmul.mubr.f32.gmra.mxu0 %v279
        %v347 = vpop.f32.mrf.mxu0
        %v348 = vadd.f32 0.0, %v347
        %v349 = vpop.f32.mrf.mxu0
        %350 = vdwg.mxu0
        %v351 = vmul.f32 %v277, %v277
        %v352 = vsel %vm271, %v351, 0.0
        %353 = vadd.xlane.f32.xlu0 %v352
        %v354 = vpop.xlane.xlu0 %353
        %v355 = vmul.f32 %v354, 0.06666667
        %v356 = vrsqrt.pop %v355
        %v357 = vmul.f32 %v355, %v356
        %vm358 = vcmp.eq.f32.partialorder %v355, inf
        %v359 = vsel %vm358, %v355, %v357
        %vm360 = vcmp.eq.f32.partialorder %v355, 0.0
        %v361 = vand.u32 %v355, 2147483648
        %v362 = vsel %vm360, %v361, %v359
        %v363 = vlaneseq
        %v364 = vshrl.u32 %v363, 7
        %v365 = vlaneseq
        %v366 = vand.u32 %v365, 127
        %vm367 = vcmp.eq.s32.totalorder %v364, %v366
        %v368 = vsel %vm367, 1, 0
        %v369 = vcvt.s32.f32 %v368
        %v370 = vmul.f32 %v348, %v369
        %vm371 = vcmask 64512
        %v372 = vsel %vm371, %v370, 0.0
        %v373 = vrot.slane %v372, 4
        %v374 = vadd.f32 %v372, %v373
        %v375 = vrot.slane %v374, 2
        %v376 = vadd.f32 %v374, %v375
        %v377 = vrot.slane %v376, 1
        %v378 = vadd.f32 %v376, %v377
        %v379 = vmul.f32 %v378, 0.06666667
        %v380 = vrsqrt.pop %v379
        %v381 = vmul.f32 %v379, %v380
        %vm382 = vcmp.eq.f32.partialorder %v379, inf
        %v383 = vsel %vm382, %v379, %v381
        %vm384 = vcmp.eq.f32.partialorder %v379, 0.0
        %v385 = vand.u32 %v379, 2147483648
        %v386 = vsel %vm384, %v385, %v383
        %v387 = vmul.f32 %v362, %v386
        %v388 = vadd.f32 %v387, 1e-08
        %v389 = vrcp.pop %v388
        %v390 = vmul.f32 %v348, %v389
        %v391 = vadd.f32 %v390, %v369
        %v392 = vsel %vm371, %v390, 0.0
        %393 = vadd.xlane.f32.xlu0 %v392
        %v394 = vpop.xlane.xlu0 %393
        %v395 = vadd.f32 %v394, 1.0
        %v396 = vrot.slane %v392, 4
        %v397 = vadd.f32 %v392, %v396
        %v398 = vrot.slane %v397, 2
        %v399 = vadd.f32 %v397, %v398
        %v400 = vrot.slane %v399, 1
        %v401 = vadd.f32 %v399, %v400
        %v402 = vadd.f32 %v401, 1.0
        %v403 = vrsqrt.pop %v395
        %v404 = vmul.f32 %v391, %v403
        %v405 = vrsqrt.pop %v402
        %v406 = vmul.f32 %v404, %v405
        %v407 = vpack.c.bf16 %v406, %v406
        %v408 = vld [vmem:[#allocation5] sm:$0xff]
        %v409 = vld [vmem:[#allocation5 + $0x8] sm:$0xff]
        %v410 = vpack.c.bf16 %v409, %v408
        %v411 = vld [vmem:[#allocation7] sm:$0xff]
        %v412 = vld [vmem:[#allocation7 + $0x8] sm:$0xff]
        %v413 = vld [vmem:[#allocation7 + $0x10] sm:$0xff]
        %v414 = vld [vmem:[#allocation7 + $0x18] sm:$0xff]
        %v415 = vld [vmem:[#allocation7 + $0x20] sm:$0xff]
        %v416 = vld [vmem:[#allocation7 + $0x28] sm:$0xff]
        %v417 = vld [vmem:[#allocation7 + $0x30] sm:$0xff]
        %v418 = vld [vmem:[#allocation7 + $0x38] sm:$0xff]
        %v419 = vld [vmem:[#allocation7 + $0x40] sm:$0xff]
        %v420 = vld [vmem:[#allocation7 + $0x48] sm:$0xff]
        %v421 = vld [vmem:[#allocation7 + $0x50] sm:$0xff]
        %v422 = vld [vmem:[#allocation7 + $0x58] sm:$0xff]
        %v423 = vld [vmem:[#allocation7 + $0x60] sm:$0xff]
        %v424 = vld [vmem:[#allocation7 + $0x68] sm:$0xff]
        %v425 = vld [vmem:[#allocation7 + $0x70] sm:$0xff]
        %v426 = vld [vmem:[#allocation7 + $0x78] sm:$0xff]
        %v427 = vpack.c.bf16 %v412, %v411
        %v428 = vpack.c.bf16 %v414, %v413
        %v429 = vpack.c.bf16 %v416, %v415
        %v430 = vpack.c.bf16 %v418, %v417
        %v431 = vpack.c.bf16 %v420, %v419
        %v432 = vpack.c.bf16 %v422, %v421
        %v433 = vpack.c.bf16 %v424, %v423
        %v434 = vpack.c.bf16 %v426, %v425
        %v435 = vpack.c.bf16 %v270, %v270
        %v436 = vld [vmem:[%s2] sm:$0x1]
        %v438 = vlaneseq
        %v439 = vshrl.u32 %v438, 7
        %v440 = vsub.s32 0, %v439
        %v441 = vrot.slane %v436, %v440
        %v444 = vsel %vm271, %v435, 0
        %446 = vmatprep.subr.bf16.mxu0 0
        %447 = vmatpush1.bf16.msra.mxu0 0
        %448 = vmatprep.subr.bf16.mxu0 0
        %449 = vmatpush1.bf16.msra.mxu0 0
        %450 = vmatprep.subr.bf16.mxu0 0
        %451 = vmatpush1.bf16.msra.mxu0 0
        %452 = vmatprep.subr.bf16.mxu0 0
        %453 = vmatpush1.bf16.msra.mxu0 0
        %454 = vmatprep.subr.bf16.mxu0 0
        %455 = vmatpush1.bf16.msra.mxu0 0
        %456 = vmatprep.subr.bf16.mxu0 0
        %457 = vmatpush1.bf16.msra.mxu0 0
        %458 = vmatprep.subr.bf16.mxu0 0
        %459 = vmatpush1.bf16.msra.mxu0 0
        %460 = vmatprep.subr.bf16.mxu0 0
        %461 = vmatpush1.bf16.msra.mxu0 %v410
        %462 = vmatprep.subr.bf16.mxu0 0
        %463 = vmatpush2.bf16.msra.mxu0 0
        %464 = vmatprep.subr.bf16.mxu0 0
        %465 = vmatpush2.bf16.msra.mxu0 0
        %466 = vmatprep.subr.bf16.mxu0 0
        %467 = vmatpush2.bf16.msra.mxu0 0
        %468 = vmatprep.subr.bf16.mxu0 0
        %469 = vmatpush2.bf16.msra.mxu0 0
        %470 = vmatprep.subr.bf16.mxu0 0
        %471 = vmatpush2.bf16.msra.mxu0 0
        %472 = vmatprep.subr.bf16.mxu0 0
        %473 = vmatpush2.bf16.msra.mxu0 0
        %474 = vmatprep.subr.bf16.mxu0 0
        %475 = vmatpush2.bf16.msra.mxu0 0
        %476 = vmatprep.subr.bf16.mxu0 0
        %477 = vmatpush2.bf16.msra.mxu0 0
        %478 = vmatprep.mubr.bf16.mxu0 0
        %479 = vmatmul.mubr.bf16.gmra.mxu0 %v444
        %v480 = vpop.f32.mrf.mxu0
        %v481 = vadd.f32 %v441, %v480
        %v482 = vpop.f32.mrf.mxu0
        %v483 = vpop.f32.mrf.mxu0
        %v484 = vpop.f32.mrf.mxu0
        %485 = vdwg.mxu0
        %v486 = vpack.c.bf16 %v481, %v481
        %v488 = vsel %vm371, %v407, 0
        %vm490 = vcmask 1043456
        %v492 = vsel %vm490, %v486, 0
        %494 = vmatprep.subr.bf16.mxu0 0
        %495 = vmatpush1.bf16.msra.mxu0 0
        %496 = vmatprep.subr.bf16.mxu0 0
        %497 = vmatpush1.bf16.msra.mxu0 0
        %498 = vmatprep.subr.bf16.mxu0 0
        %499 = vmatpush1.bf16.msra.mxu0 0
        %500 = vmatprep.subr.bf16.mxu0 0
        %501 = vmatpush1.bf16.msra.mxu0 0
        %502 = vmatprep.subr.bf16.mxu0 0
        %503 = vmatpush1.bf16.msra.mxu0 0
        %504 = vmatprep.subr.bf16.mxu0 0
        %505 = vmatpush1.bf16.msra.mxu0 0
        %506 = vmatprep.subr.bf16.mxu0 0
        %507 = vmatpush1.bf16.msra.mxu0 0
        %508 = vmatprep.subr.bf16.mxu0 0
        %509 = vmatpush1.bf16.msra.mxu0 %v492
        %510 = vmatprep.subr.bf16.mxu0 0
        %511 = vmatpush2.bf16.msra.mxu0 0
        %512 = vmatprep.subr.bf16.mxu0 0
        %513 = vmatpush2.bf16.msra.mxu0 0
        %514 = vmatprep.subr.bf16.mxu0 0
        %515 = vmatpush2.bf16.msra.mxu0 0
        %516 = vmatprep.subr.bf16.mxu0 0
        %517 = vmatpush2.bf16.msra.mxu0 0
        %518 = vmatprep.subr.bf16.mxu0 0
        %519 = vmatpush2.bf16.msra.mxu0 0
        %520 = vmatprep.subr.bf16.mxu0 0
        %521 = vmatpush2.bf16.msra.mxu0 0
        %522 = vmatprep.subr.bf16.mxu0 0
        %523 = vmatpush2.bf16.msra.mxu0 0
        %524 = vmatprep.subr.bf16.mxu0 0
        %525 = vmatpush2.bf16.msra.mxu0 0
        %526 = vmatprep.mubr.bf16.mxu0 0
        %527 = vmatmul.mubr.bf16.gmra.mxu0 %v488
        %v528 = vpop.f32.mrf.mxu0
        %v529 = vadd.f32 0.0, %v528
        %v530 = vpop.f32.mrf.mxu0
        %v531 = vpop.f32.mrf.mxu0
        %v532 = vpop.f32.mrf.mxu0
        %533 = vdwg.mxu0
        %v534 = vmax.f32 %v529, 0.0
        %v535 = vpack.c.bf16 %v534, %v534
        %v536 = vld [vmem:[%s4] sm:$0x1]
        %v538 = vlaneseq
        %v539 = vshrl.u32 %v538, 7
        %v540 = vsub.s32 0, %v539
        %v541 = vrot.slane %v536, %v540
        %543 = vmatprep.subr.bf16.mxu0 0
        %544 = vmatpush1.bf16.msra.mxu0 %v434
        %545 = vmatprep.subr.bf16.mxu0 0
        %546 = vmatpush1.bf16.msra.mxu0 %v433
        %547 = vmatprep.subr.bf16.mxu0 0
        %548 = vmatpush1.bf16.msra.mxu0 %v432
        %549 = vmatprep.subr.bf16.mxu0 0
        %550 = vmatpush1.bf16.msra.mxu0 %v431
        %551 = vmatprep.subr.bf16.mxu0 0
        %552 = vmatpush1.bf16.msra.mxu0 %v430
        %553 = vmatprep.subr.bf16.mxu0 0
        %554 = vmatpush1.bf16.msra.mxu0 %v429
        %555 = vmatprep.subr.bf16.mxu0 0
        %556 = vmatpush1.bf16.msra.mxu0 %v428
        %557 = vmatprep.subr.bf16.mxu0 0
        %558 = vmatpush1.bf16.msra.mxu0 %v427
        %559 = vmatprep.subr.bf16.mxu0 0
        %560 = vmatpush2.bf16.msra.mxu0 0
        %561 = vmatprep.subr.bf16.mxu0 0
        %562 = vmatpush2.bf16.msra.mxu0 0
        %563 = vmatprep.subr.bf16.mxu0 0
        %564 = vmatpush2.bf16.msra.mxu0 0
        %565 = vmatprep.subr.bf16.mxu0 0
        %566 = vmatpush2.bf16.msra.mxu0 0
        %567 = vmatprep.subr.bf16.mxu0 0
        %568 = vmatpush2.bf16.msra.mxu0 0
        %569 = vmatprep.subr.bf16.mxu0 0
        %570 = vmatpush2.bf16.msra.mxu0 0
        %571 = vmatprep.subr.bf16.mxu0 0
        %572 = vmatpush2.bf16.msra.mxu0 0
        %573 = vmatprep.subr.bf16.mxu0 0
        %574 = vmatpush2.bf16.msra.mxu0 0
        %575 = vmatprep.mubr.bf16.mxu0 0
        %576 = vmatmul.mubr.bf16.gmra.mxu0 %v535
        %v577 = vpop.f32.mrf.mxu0
        %v578 = vadd.f32 %v541, %v577
        %v579 = vpop.f32.mrf.mxu0
        %v580 = vpop.f32.mrf.mxu0
        %v581 = vpop.f32.mrf.mxu0
        %582 = vdwg.mxu0
        %v583 = vpack.c.bf16 %v578, %v578
        %v585 = vsel %vm490, %v583, 0
        %587 = vmatprep.subr.bf16.mxu0 0
        %588 = vmatpush1.bf16.msra.mxu0 0
        %589 = vmatprep.subr.bf16.mxu0 0
        %590 = vmatpush1.bf16.msra.mxu0 0
        %591 = vmatprep.subr.bf16.mxu0 0
        %592 = vmatpush1.bf16.msra.mxu0 0
        %593 = vmatprep.subr.bf16.mxu0 0
        %594 = vmatpush1.bf16.msra.mxu0 0
        %595 = vmatprep.subr.bf16.mxu0 0
        %596 = vmatpush1.bf16.msra.mxu0 0
        %597 = vmatprep.subr.bf16.mxu0 0
        %598 = vmatpush1.bf16.msra.mxu0 0
        %599 = vmatprep.subr.bf16.mxu0 0
        %600 = vmatpush1.bf16.msra.mxu0 0
        %601 = vmatprep.subr.bf16.mxu0 0
        %602 = vmatpush1.bf16.msra.mxu0 %v585
        %603 = vmatprep.subr.bf16.mxu0 0
        %604 = vmatpush2.bf16.msra.mxu0 0
        %605 = vmatprep.subr.bf16.mxu0 0
        %606 = vmatpush2.bf16.msra.mxu0 0
        %607 = vmatprep.subr.bf16.mxu0 0
        %608 = vmatpush2.bf16.msra.mxu0 0
        %609 = vmatprep.subr.bf16.mxu0 0
        %610 = vmatpush2.bf16.msra.mxu0 0
        %611 = vmatprep.subr.bf16.mxu0 0
        %612 = vmatpush2.bf16.msra.mxu0 0
        %613 = vmatprep.subr.bf16.mxu0 0
        %614 = vmatpush2.bf16.msra.mxu0 0
        %615 = vmatprep.subr.bf16.mxu0 0
        %616 = vmatpush2.bf16.msra.mxu0 0
        %617 = vmatprep.subr.bf16.mxu0 0
        %618 = vmatpush2.bf16.msra.mxu0 0
        %619 = vmatprep.mubr.bf16.mxu0 0
        %620 = vmatmul.mubr.bf16.gmra.mxu0 %v488
        %v621 = vpop.f32.mrf.mxu0
        %v622 = vadd.f32 0.0, %v621
        %v623 = vpop.f32.mrf.mxu0
        %v624 = vpop.f32.mrf.mxu0
        %v625 = vpop.f32.mrf.mxu0
        %626 = vdwg.mxu0
        %v627 = vmax.f32 %v622, 0.0
        %628 = vst [vmem:[%s268] sm:$0xff] %v627
        %s629 = sand.u32 %s141, 1
        %s630 = scalar_lea.sflag [#allocation4], %s629
        %s631 = sand.u32 %s141, 1
        %s632 = smul.addr %s631, 8
        %s633 = scalar_lea.vmem [#allocation8], %s632
        // Predicated region
        $region53: #{tpu_custom_call.1} parent=39 // pred_check
          %p634 = pneg %p151
        $region54: #{tpu_custom_call.1} parent=39 // pred_check_branch
          %636 = sbr.rel (%p634) target = $region56
        $region55: #{tpu_custom_call.1} parent=39 // pred_region
          %s638 = ssub.s32 128, 128
          %639 = vsyncadd %s630, %s638
          %s640 = smul.addr %s23, 128
          %s641 = scalar_lea.hbm %s5, %s640
          %s643 = sshll.u32 %s633, 4
          %s644 = int_to_ptr.vmem [resolvable:$true] %s643
          %646 = dma.vmem_to_hbm [thread:$0]  %s644, 128, %s641, %s630
        $region56: #{tpu_custom_call.1} parent=39 // pred_fallthru
          _
      $region40: #{tpu_custom_call.1} parent=5 // pred_fallthru
        _
      %p647 = scmp.le.s32.totalorder 2, %s18
      // Predicated region
      $region57: #{tpu_custom_call.1} parent=5 // pred_check
        %p648 = pneg %p647
      $region58: #{tpu_custom_call.1} parent=5 // pred_check_branch
        %650 = sbr.rel (%p648) target = $region60
      $region59: #{tpu_custom_call.1} parent=5 // pred_region
        %s651 = ssub.s32 %s18, 2
        // Predicated region
        $region61: #{tpu_custom_call.1} parent=59 // pred_check
          %p652 = pneg %p157
        $region62: #{tpu_custom_call.1} parent=59 // pred_check_branch
          %654 = sbr.rel (%p652) target = $region64
        $region63: #{tpu_custom_call.1} parent=59 // pred_region
          %s655 = sand.u32 %s142, 1
          %s656 = scalar_lea.sflag [#allocation4], %s655
          %s657 = sand.u32 %s142, 1
          %s658 = smul.addr %s657, 8
          %s659 = scalar_lea.vmem [#allocation8], %s658
          %660 = dma.done %s656, 128
        $region64: #{tpu_custom_call.1} parent=59 // pred_fallthru
          _
      $region60: #{tpu_custom_call.1} parent=5 // pred_fallthru
        _
    $region6: #{tpu_custom_call.1} parent=1 // loop_footer
      %s22 = sadd.s32 1, %s18
    $region7: #{tpu_custom_call.1} parent=1 // loop_footer_branch
      %17 = sbr.rel target = $region3
    $region8: #{tpu_custom_call.1} parent=1 // loop_exit
      _
    %661 = vsyncpa [#allocation3], 1
    %s662 = scalar_lea.sflag [#allocation3], 1
    %663 = vsyncpa %s662, 1
    %664 = vsyncpa [#allocation6], 1
    %665 = vsyncpa [#allocation4], 1
    %s666 = scalar_lea.sflag [#allocation4], 1
    %667 = vsyncpa %s666, 1

</llo_original>
